<compile_context>
chip_gen: v6e
topology: v6e:2x2x1
jax: 0.10.0
libtpu: 0.0.40
codegen_flags: <defaults>
</compile_context>

<pallas_src>
import math
import functools

import jax
import jax.numpy as jnp
from jax.experimental import pallas as pl
from jax.experimental.pallas import tpu as pltpu


def _round_up(x, m):
    return ((x + m - 1) // m) * m


def _gelu_tanh(x):
    # 0.5 * x * (1 + tanh(sqrt(2/pi) * (x + 0.044715 * x^3)))  -- matches the PyTorch module's gelu
    c = math.sqrt(2.0 / math.pi)
    return 0.5 * x * (1.0 + jnp.tanh(c * (x + 0.044715 * x * x * x)))


def _mlm_head_kernel(x_ref, w1_ref, b1_ref, g_ref, beta_ref,
                     dec_ref, lmb_ref, o_ref, h_ref):
    # x_ref:   (tm, H)   row tile of flattened hidden states            (input dtype)
    # w1_ref:  (H, H)    dense weight, [in, out] layout                 (input dtype)
    # b1_ref:  (1, H)    dense bias
    # g_ref:   (1, H)    layernorm gamma
    # beta_ref:(1, H)    layernorm beta
    # dec_ref: (H, tn)   decoder (tied embedding) weight tile, [H, V] layout
    # lmb_ref: (1, tn)   lm_bias tile
    # o_ref:   (tm, tn)  output logits tile
    # h_ref:   (tm, H)   f32 VMEM scratch: dense+gelu+layernorm result, reused across j
    j = pl.program_id(1)

    @pl.when(j == 0)
    def _():
        # dense (MXU, native dtype operands, f32 accumulation)
        h = jnp.dot(x_ref[...], w1_ref[...], preferred_element_type=jnp.float32)
        h = h + b1_ref[...].astype(jnp.float32)
        # gelu (tanh approximation, f32)
        h = _gelu_tanh(h)
        # layernorm over last dim (biased variance, eps=1e-5 like nn.LayerNorm), f32 stats
        mean = jnp.mean(h, axis=-1, keepdims=True)
        centered = h - mean
        var = jnp.mean(centered * centered, axis=-1, keepdims=True)
        inv = jax.lax.rsqrt(var + 1e-5)
        h = centered * inv * g_ref[...].astype(jnp.float32) + beta_ref[...].astype(jnp.float32)
        h_ref[...] = h

    # decoder projection for this vocab tile (operands in weight dtype, f32 accumulation)
    h = h_ref[...].astype(dec_ref.dtype)
    logits = jnp.dot(h, dec_ref[...], preferred_element_type=jnp.float32)
    logits = logits + lmb_ref[...].astype(jnp.float32)
    o_ref[...] = logits.astype(o_ref.dtype)


def prepare_params(torch_layout_params):
    """One-time conversion from PyTorch Linear layouts to kernel-friendly [in, out] layouts."""
    p = torch_layout_params
    H = p["dense_w"].shape[0]
    V = p["lm_bias"].shape[0]
    return {
        "dense_w_t": jnp.transpose(p["dense_w"]),        # [H, H], in -> out
        "dense_b": p["dense_b"].reshape(1, H),
        "ln_g": p["ln_g"].reshape(1, H),
        "ln_b": p["ln_b"].reshape(1, H),
        "embedding_w_t": jnp.transpose(p["embedding_w"]),  # [V, H] -> [H, V]
        "lm_bias": p["lm_bias"].reshape(1, V),
    }


@functools.partial(jax.jit, static_argnames=("tm", "tn"))
def bert_masked_lm_head(hidden_states, prepared_params, *, tm=None, tn=None):
    """hidden_states: [B, S, H] -> logits [B, S, V].  prepared_params from prepare_params()."""
    B, S, H = hidden_states.shape
    V = prepared_params["lm_bias"].shape[-1]
    M = B * S

    # --- tile sizes (MXU-friendly; shrink for small problems) ---
    if tm is None:
        tm = min(256, _round_up(M, 8))          # row tile: multiple of 8, target >= 256
    if tn is None:
        tn = min(512, _round_up(V, 128))        # vocab tile: multiple of 128
    M_pad = _round_up(M, tm)
    V_pad = _round_up(V, tn)

    x = hidden_states.reshape(M, H)
    if M_pad != M:
        x = jnp.pad(x, ((0, M_pad - M), (0, 0)))

    w1_t = prepared_params["dense_w_t"]               # [H, H]
    b1 = prepared_params["dense_b"]                   # [1, H]
    gamma = prepared_params["ln_g"]                   # [1, H]
    beta = prepared_params["ln_b"]                    # [1, H]
    dec_t = prepared_params["embedding_w_t"]          # [H, V]
    lm_bias = prepared_params["lm_bias"]              # [1, V]
    if V_pad != V:
        dec_t = jnp.pad(dec_t, ((0, 0), (0, V_pad - V)))
        lm_bias = jnp.pad(lm_bias, ((0, 0), (0, V_pad - V)))

    grid = (M_pad // tm, V_pad // tn)

    cost = pl.CostEstimate(
        flops=2 * M_pad * H * (H + V_pad),
        transcendentals=M_pad * H,
        bytes_accessed=(x.size + w1_t.size + dec_t.size) * x.dtype.itemsize
        + M_pad * V_pad * hidden_states.dtype.itemsize,
    )

    out = pl.pallas_call(
        _mlm_head_kernel,
        out_shape=jax.ShapeDtypeStruct((M_pad, V_pad), hidden_states.dtype),
        grid_spec=pltpu.PrefetchScalarGridSpec(
            num_scalar_prefetch=0,
            grid=grid,
            in_specs=[
                pl.BlockSpec((tm, H), lambda i, j: (i, 0)),    # x row tile
                pl.BlockSpec((H, H), lambda i, j: (0, 0)),     # dense weight (resident)
                pl.BlockSpec((1, H), lambda i, j: (0, 0)),     # dense bias
                pl.BlockSpec((1, H), lambda i, j: (0, 0)),     # ln gamma
                pl.BlockSpec((1, H), lambda i, j: (0, 0)),     # ln beta
                pl.BlockSpec((H, tn), lambda i, j: (0, j)),    # decoder weight tile (streamed)
                pl.BlockSpec((1, tn), lambda i, j: (0, j)),    # lm bias tile
            ],
            out_specs=pl.BlockSpec((tm, tn), lambda i, j: (i, j)),
            scratch_shapes=[pltpu.VMEM((tm, H), jnp.float32)],  # cached dense+gelu+ln result
        ),
        compiler_params=pltpu.CompilerParams(
            # i is independent across row tiles (megacore-shardable on v7x);
            # j must run in order because the scratch is filled at j == 0.
            dimension_semantics=("parallel", "arbitrary"),
            vmem_limit_bytes=64 * 1024 * 1024,
        ),
        cost_estimate=cost,
    )(x, w1_t, b1, gamma, beta, dec_t, lm_bias)

    return out[:M, :V].reshape(B, S, V)


def init_params(key, hidden_size, vocab_size):
    """PyTorch-layout parameters (Linear weights are [out, in])."""
    k1, k2, k3 = jax.random.split(key, 3)
    return {
        "dense_w": jax.random.normal(k1, (hidden_size, hidden_size), jnp.float32) * 0.02,
        "dense_b": jax.random.normal(k2, (hidden_size,), jnp.float32) * 0.02,
        "ln_g": jnp.ones((hidden_size,), jnp.float32),
        "ln_b": jnp.zeros((hidden_size,), jnp.float32),
        # tied embedding weights: [vocab_size, hidden_size] (nn.Linear weight layout)
        "embedding_w": jax.random.normal(k3, (vocab_size, hidden_size), jnp.float32) * 0.02,
        "lm_bias": jnp.zeros((vocab_size,), jnp.float32),
    }


def _reference(hidden_states, params):
    # pure-JAX reference of the PyTorch forward (PyTorch-layout weights)
    x = hidden_states
    h = x @ params["dense_w"].T + params["dense_b"]
    h = _gelu_tanh(h)
    mean = jnp.mean(h, axis=-1, keepdims=True)
    var = jnp.mean((h - mean) ** 2, axis=-1, keepdims=True)
    h = (h - mean) * jax.lax.rsqrt(var + 1e-5) * params["ln_g"] + params["ln_b"]
    return h @ params["embedding_w"].T + params["lm_bias"]


if __name__ == "__main__":
    B, S, H, V = 2, 8, 32, 128
    key = jax.random.PRNGKey(0)
    kx, kp = jax.random.split(key)
    hidden_states = jax.random.normal(kx, (B, S, H), jnp.float32)
    params = init_params(kp, H, V)

    # One-time layout preparation (done outside the per-call hot path).
    prepared = prepare_params(params)

    out = bert_masked_lm_head(hidden_states, prepared)
    out = jax.block_until_ready(out)

    ref = _reference(hidden_states, params)
    assert out.shape == (B, S, V)
    assert jnp.allclose(out, ref, atol=1e-4, rtol=1e-4), "mismatch vs reference"
    print("KERNEL_OK")
</pallas_src>

<mosaic_0001>
module attributes {stable_mosaic.version = 11 : i64} {
  func.func @_mlm_head_kernel(%arg0: i32, %arg1: i32, %arg2: memref<16x32xf32, #tpu.memory_space<vmem>>, %arg3: memref<32x32xf32, #tpu.memory_space<vmem>>, %arg4: memref<1x32xf32, #tpu.memory_space<vmem>>, %arg5: memref<1x32xf32, #tpu.memory_space<vmem>>, %arg6: memref<1x32xf32, #tpu.memory_space<vmem>>, %arg7: memref<32x128xf32, #tpu.memory_space<vmem>>, %arg8: memref<1x128xf32, #tpu.memory_space<vmem>>, %arg9: memref<16x128xf32, #tpu.memory_space<vmem>>, %arg10: memref<16x32xf32, #tpu.memory_space<vmem>>) attributes {dimension_semantics = [#tpu.dimension_semantics<parallel>, #tpu.dimension_semantics<arbitrary>], iteration_bounds = array<i64: 1, 1>, scalar_prefetch = 0 : i64, scratch_operands = 1 : i64, tpu.core_type = #tpu.core_type<tc>, window_params = [{transform_indices = @transform_0, window_bounds = array<i64: 16, 32>}, {pipeline_mode = #tpu.pipeline_mode<synchronous>, transform_indices = @transform_1, window_bounds = array<i64: 32, 32>}, {pipeline_mode = #tpu.pipeline_mode<synchronous>, transform_indices = @transform_2, window_bounds = array<i64: 1, 32>}, {pipeline_mode = #tpu.pipeline_mode<synchronous>, transform_indices = @transform_3, window_bounds = array<i64: 1, 32>}, {pipeline_mode = #tpu.pipeline_mode<synchronous>, transform_indices = @transform_4, window_bounds = array<i64: 1, 32>}, {transform_indices = @transform_5, window_bounds = array<i64: 32, 128>}, {transform_indices = @transform_6, window_bounds = array<i64: 1, 128>}, {transform_indices = @transform_7, window_bounds = array<i64: 16, 128>}]} {
    %c0_i32 = arith.constant 0 : i32
    %0 = arith.cmpi eq, %arg1, %c0_i32 : i32
    %1 = arith.extui %0 : i1 to i32
    %c0_i32_0 = arith.constant 0 : i32
    %2 = arith.cmpi ne, %1, %c0_i32_0 : i32
    scf.if %2 {
      %c0_8 = arith.constant 0 : index
      %c0_9 = arith.constant 0 : index
      %10 = vector.load %arg2[%c0_8, %c0_9] : memref<16x32xf32, #tpu.memory_space<vmem>>, vector<16x32xf32>
      %c0_10 = arith.constant 0 : index
      %c0_11 = arith.constant 0 : index
      %11 = vector.load %arg3[%c0_10, %c0_11] : memref<32x32xf32, #tpu.memory_space<vmem>>, vector<32x32xf32>
      %cst_12 = arith.constant dense<0.000000e+00> : vector<16x32xf32>
      %12 = tpu.matmul %10, %11, %cst_12 {dimension_numbers = #tpu.dot_dimension_numbers<[1], [0], [0], [1], [0, 0, 1, 1], [], []>} : vector<16x32xf32>, vector<32x32xf32>, vector<16x32xf32> -> vector<16x32xf32>
      %c0_13 = arith.constant 0 : index
      %c0_14 = arith.constant 0 : index
      %13 = vector.load %arg4[%c0_13, %c0_14] : memref<1x32xf32, #tpu.memory_space<vmem>>, vector<1x32xf32>
      %14 = vector.broadcast %13 : vector<1x32xf32> to vector<16x32xf32>
      %15 = arith.addf %12, %14 : vector<16x32xf32>
      %cst_15 = arith.constant 5.000000e-01 : f32
      %16 = vector.broadcast %cst_15 : f32 to vector<16x32xf32>
      %17 = arith.mulf %16, %15 : vector<16x32xf32>
      %cst_16 = arith.constant 4.471500e-02 : f32
      %18 = vector.broadcast %cst_16 : f32 to vector<16x32xf32>
      %19 = arith.mulf %18, %15 : vector<16x32xf32>
      %20 = arith.mulf %19, %15 : vector<16x32xf32>
      %21 = arith.mulf %20, %15 : vector<16x32xf32>
      %22 = arith.addf %15, %21 : vector<16x32xf32>
      %cst_17 = arith.constant 0.797884583 : f32
      %23 = vector.broadcast %cst_17 : f32 to vector<16x32xf32>
      %24 = arith.mulf %23, %22 : vector<16x32xf32>
      %25 = math.tanh %24 : vector<16x32xf32>
      %cst_18 = arith.constant 1.000000e+00 : f32
      %26 = vector.broadcast %cst_18 : f32 to vector<16x32xf32>
      %27 = arith.addf %26, %25 : vector<16x32xf32>
      %28 = arith.mulf %17, %27 : vector<16x32xf32>
      %cst_19 = arith.constant dense<0.000000e+00> : vector<16xf32>
      %29 = vector.multi_reduction <add>, %28, %cst_19 [1] : vector<16x32xf32> to vector<16xf32>
      %30 = vector.shape_cast %29 : vector<16xf32> to vector<16x1xf32>
      %cst_20 = arith.constant 3.200000e+01 : f32
      %31 = vector.broadcast %cst_20 : f32 to vector<16x1xf32>
      %32 = arith.divf %30, %31 : vector<16x1xf32>
      %33 = vector.broadcast %32 : vector<16x1xf32> to vector<16x32xf32>
      %34 = arith.subf %28, %33 : vector<16x32xf32>
      %35 = arith.mulf %34, %34 : vector<16x32xf32>
      %cst_21 = arith.constant dense<0.000000e+00> : vector<16xf32>
      %36 = vector.multi_reduction <add>, %35, %cst_21 [1] : vector<16x32xf32> to vector<16xf32>
      %37 = vector.shape_cast %36 : vector<16xf32> to vector<16x1xf32>
      %cst_22 = arith.constant 3.200000e+01 : f32
      %38 = vector.broadcast %cst_22 : f32 to vector<16x1xf32>
      %39 = arith.divf %37, %38 : vector<16x1xf32>
      %cst_23 = arith.constant 9.99999974E-6 : f32
      %40 = vector.broadcast %cst_23 : f32 to vector<16x1xf32>
      %41 = arith.addf %39, %40 : vector<16x1xf32>
      %42 = math.rsqrt %41 : vector<16x1xf32>
      %43 = vector.broadcast %42 : vector<16x1xf32> to vector<16x32xf32>
      %44 = arith.mulf %34, %43 : vector<16x32xf32>
      %c0_24 = arith.constant 0 : index
      %c0_25 = arith.constant 0 : index
      %45 = vector.load %arg5[%c0_24, %c0_25] : memref<1x32xf32, #tpu.memory_space<vmem>>, vector<1x32xf32>
      %46 = vector.broadcast %45 : vector<1x32xf32> to vector<16x32xf32>
      %47 = arith.mulf %44, %46 : vector<16x32xf32>
      %c0_26 = arith.constant 0 : index
      %c0_27 = arith.constant 0 : index
      %48 = vector.load %arg6[%c0_26, %c0_27] : memref<1x32xf32, #tpu.memory_space<vmem>>, vector<1x32xf32>
      %49 = vector.broadcast %48 : vector<1x32xf32> to vector<16x32xf32>
      %50 = arith.addf %47, %49 : vector<16x32xf32>
      %c0_28 = arith.constant 0 : index
      %c0_29 = arith.constant 0 : index
      %51 = vector.load %arg10[%c0_28, %c0_29] : memref<16x32xf32, #tpu.memory_space<vmem>>, vector<16x32xf32>
      tpu.vector_store %arg10[%c0_28, %c0_29], %50 {strides = array<i32>} : memref<16x32xf32, #tpu.memory_space<vmem>>, vector<16x32xf32>,
    } else {
    }
    %c0 = arith.constant 0 : index
    %c0_1 = arith.constant 0 : index
    %3 = vector.load %arg10[%c0, %c0_1] : memref<16x32xf32, #tpu.memory_space<vmem>>, vector<16x32xf32>
    %c0_2 = arith.constant 0 : index
    %c0_3 = arith.constant 0 : index
    %4 = vector.load %arg7[%c0_2, %c0_3] : memref<32x128xf32, #tpu.memory_space<vmem>>, vector<32x128xf32>
    %cst = arith.constant dense<0.000000e+00> : vector<16x128xf32>
    %5 = tpu.matmul %3, %4, %cst {dimension_numbers = #tpu.dot_dimension_numbers<[1], [0], [0], [1], [0, 0, 1, 1], [], []>} : vector<16x32xf32>, vector<32x128xf32>, vector<16x128xf32> -> vector<16x128xf32>
    %c0_4 = arith.constant 0 : index
    %c0_5 = arith.constant 0 : index
    %6 = vector.load %arg8[%c0_4, %c0_5] : memref<1x128xf32, #tpu.memory_space<vmem>>, vector<1x128xf32>
    %7 = vector.broadcast %6 : vector<1x128xf32> to vector<16x128xf32>
    %8 = arith.addf %5, %7 : vector<16x128xf32>
    %c0_6 = arith.constant 0 : index
    %c0_7 = arith.constant 0 : index
    %9 = vector.load %arg9[%c0_6, %c0_7] : memref<16x128xf32, #tpu.memory_space<vmem>>, vector<16x128xf32>
    tpu.vector_store %arg9[%c0_6, %c0_7], %8 {strides = array<i32>} : memref<16x128xf32, #tpu.memory_space<vmem>>, vector<16x128xf32>,
    return
  }
  func.func @transform_0(%arg0: i32, %arg1: i32) -> (i32, i32) {
    %c0_i32 = arith.constant 0 : i32
    %c0_i32_0 = arith.constant 0 : i32
    return %arg0, %c0_i32 : i32, i32
  }
  func.func @transform_1(%arg0: i32, %arg1: i32) -> (i32, i32) {
    %c0_i32 = arith.constant 0 : i32
    %c0_i32_0 = arith.constant 0 : i32
    %c0_i32_1 = arith.constant 0 : i32
    return %c0_i32, %c0_i32_0 : i32, i32
  }
  func.func @transform_2(%arg0: i32, %arg1: i32) -> (i32, i32) {
    %c0_i32 = arith.constant 0 : i32
    %c0_i32_0 = arith.constant 0 : i32
    %c0_i32_1 = arith.constant 0 : i32
    return %c0_i32, %c0_i32_0 : i32, i32
  }
  func.func @transform_3(%arg0: i32, %arg1: i32) -> (i32, i32) {
    %c0_i32 = arith.constant 0 : i32
    %c0_i32_0 = arith.constant 0 : i32
    %c0_i32_1 = arith.constant 0 : i32
    return %c0_i32, %c0_i32_0 : i32, i32
  }
  func.func @transform_4(%arg0: i32, %arg1: i32) -> (i32, i32) {
    %c0_i32 = arith.constant 0 : i32
    %c0_i32_0 = arith.constant 0 : i32
    %c0_i32_1 = arith.constant 0 : i32
    return %c0_i32, %c0_i32_0 : i32, i32
  }
  func.func @transform_5(%arg0: i32, %arg1: i32) -> (i32, i32) {
    %c0_i32 = arith.constant 0 : i32
    %c0_i32_0 = arith.constant 0 : i32
    return %c0_i32, %arg1 : i32, i32
  }
  func.func @transform_6(%arg0: i32, %arg1: i32) -> (i32, i32) {
    %c0_i32 = arith.constant 0 : i32
    %c0_i32_0 = arith.constant 0 : i32
    return %c0_i32, %arg1 : i32, i32
  }
  func.func @transform_7(%arg0: i32, %arg1: i32) -> (i32, i32) {
    %c0_i32 = arith.constant 0 : i32
    return %arg0, %arg1 : i32, i32
  }
}

</mosaic_0001>

<llo_original>
// kernel: bert_masked_lm_head.1
$region0: #{bert_masked_lm_head.1}
  #allocation0 [shape = 'u32[]', space=smem, size = 0x4, offset = 0x4, fixed_abs, tag = 'smem constant byte address 0x4 - core index']
  #allocation1 [shape = 'u32[144,128]{1,0:T(1,128)}', space=vmem, size = 0x12000, scoped, tag = 'internal scratch']
  #allocation2 [shape = 'f32[16,32]{1,0:T(8,128)}', space=vmem, size = 0x2000, scoped, tag = 'scratch operand']
  %s0 = inlined_call_operand.hbm [shape: f32[16,32], index: 0, kind: input, shape index: {}]
  %s1 = inlined_call_operand.hbm [shape: f32[32,32], index: 1, kind: input, shape index: {}]
  %s2 = inlined_call_operand.vmem [shape: f32[1,32], index: 2, kind: input, shape index: {}]
  %s3 = inlined_call_operand.vmem [shape: f32[1,32], index: 3, kind: input, shape index: {}]
  %s4 = inlined_call_operand.vmem [shape: f32[1,32], index: 4, kind: input, shape index: {}]
  %s5 = inlined_call_operand.hbm [shape: f32[32,128], index: 5, kind: input, shape index: {}]
  %s6 = inlined_call_operand.vmem [shape: f32[1,128], index: 6, kind: input, shape index: {}]
  %s7 = inlined_call_operand.hbm [shape: f32[16,128], index: 7, kind: output, shape index: {}]
  %s8 = sld [smem:[#allocation0]]
  $region54: #{bert_masked_lm_head.1} parent=0
    _
  %s10 = ssub.s32 1, %s8
  %s11 = scalar_select 0, %s10, %s8
  $region1: #{bert_masked_lm_head.1} parent=0
    #allocation3 [shape = 'u8[8192]{0}', space=vmem, size = 0x2000, scoped, tag = 'input window, operand 0, single buffered']
    #allocation4 [shape = 's32[1]{0}', space=sflag, size = 0x4, scoped, tag = 'scoped memory for bert_masked_lm_head.1']
    #allocation5 [shape = 's32[1]{0}', space=sflag, size = 0x4, scoped, tag = 'scoped memory for bert_masked_lm_head.1']
    #allocation6 [shape = 'u8[16384]{0}', space=vmem, size = 0x4000, scoped, tag = 'input window, operand 1, single buffered']
    #allocation7 [shape = 's32[1]{0}', space=sflag, size = 0x4, scoped, tag = 'scoped memory for bert_masked_lm_head.1']
    #allocation8 [shape = 'u8[16384]{0}', space=vmem, size = 0x4000, scoped, tag = 'input window, operand 5, single buffered']
    #allocation9 [shape = 'u8[8192]{0}', space=vmem, size = 0x2000, scoped, tag = 'output window, operand 0, single buffered']
    %12 = vsyncpa [#allocation4], 0
    %13 = vsyncpa [#allocation7], 0
    %14 = vsyncpa [#allocation5], 0
    // Predicated region
    $region2: #{bert_masked_lm_head.1} parent=1 // pred_check
      _
    $region3: #{bert_masked_lm_head.1} parent=1 // pred_check_branch
      %16 = sbr.rel (0) target = $region5
    $region4: #{bert_masked_lm_head.1} parent=1 // pred_region
      %s18 = ssub.s32 256, 256
      %19 = vsyncadd [#allocation4], %s18
      %s20 = sshll.u32 [#allocation3], 4
      %s21 = int_to_ptr.vmem [resolvable:$true] %s20
      %26 = dma.hbm_to_vmem [thread:$0]  %s0, 256, %s21, [#allocation4], 128, 128, 8
    $region5: #{bert_masked_lm_head.1} parent=1 // pred_fallthru
      _
    // Predicated region
    $region6: #{bert_masked_lm_head.1} parent=1 // pred_check
      _
    $region7: #{bert_masked_lm_head.1} parent=1 // pred_check_branch
      %28 = sbr.rel (0) target = $region9
    $region8: #{bert_masked_lm_head.1} parent=1 // pred_region
      %s30 = ssub.s32 512, 512
      %31 = vsyncadd [#allocation7], %s30
      %s32 = sshll.u32 [#allocation6], 4
      %s33 = int_to_ptr.vmem [resolvable:$true] %s32
      %38 = dma.hbm_to_vmem [thread:$0]  %s1, 512, %s33, [#allocation7], 128, 128, 8
    $region9: #{bert_masked_lm_head.1} parent=1 // pred_fallthru
      _
    // Predicated region
    $region10: #{bert_masked_lm_head.1} parent=1 // pred_check
      _
    $region11: #{bert_masked_lm_head.1} parent=1 // pred_check_branch
      %40 = sbr.rel (0) target = $region13
    $region12: #{bert_masked_lm_head.1} parent=1 // pred_region
      _
    $region13: #{bert_masked_lm_head.1} parent=1 // pred_fallthru
      _
    // Predicated region
    $region14: #{bert_masked_lm_head.1} parent=1 // pred_check
      _
    $region15: #{bert_masked_lm_head.1} parent=1 // pred_check_branch
      %42 = sbr.rel (0) target = $region17
    $region16: #{bert_masked_lm_head.1} parent=1 // pred_region
      _
    $region17: #{bert_masked_lm_head.1} parent=1 // pred_fallthru
      _
    // Predicated region
    $region18: #{bert_masked_lm_head.1} parent=1 // pred_check
      _
    $region19: #{bert_masked_lm_head.1} parent=1 // pred_check_branch
      %44 = sbr.rel (0) target = $region21
    $region20: #{bert_masked_lm_head.1} parent=1 // pred_region
      _
    $region21: #{bert_masked_lm_head.1} parent=1 // pred_fallthru
      _
    // Predicated region
    $region22: #{bert_masked_lm_head.1} parent=1 // pred_check
      _
    $region23: #{bert_masked_lm_head.1} parent=1 // pred_check_branch
      %46 = sbr.rel (0) target = $region25
    $region24: #{bert_masked_lm_head.1} parent=1 // pred_region
      %s48 = ssub.s32 512, 512
      %49 = vsyncadd [#allocation7], %s48
      %s50 = sshll.u32 [#allocation8], 4
      %s51 = int_to_ptr.vmem [resolvable:$true] %s50
      %56 = dma.hbm_to_vmem [thread:$0]  %s5, 512, %s51, [#allocation7], 128, 128, 8
    $region25: #{bert_masked_lm_head.1} parent=1 // pred_fallthru
      _
    // Predicated region
    $region26: #{bert_masked_lm_head.1} parent=1 // pred_check
      _
    $region27: #{bert_masked_lm_head.1} parent=1 // pred_check_branch
      %58 = sbr.rel (0) target = $region29
    $region28: #{bert_masked_lm_head.1} parent=1 // pred_region
      _
    $region29: #{bert_masked_lm_head.1} parent=1 // pred_fallthru
      _
    // Predicated region
    $region30: #{bert_masked_lm_head.1} parent=1 // pred_check
      _
    $region31: #{bert_masked_lm_head.1} parent=1 // pred_check_branch
      %60 = sbr.rel (0) target = $region33
    $region32: #{bert_masked_lm_head.1} parent=1 // pred_region
      %61 = dma.done [#allocation4], 256
    $region33: #{bert_masked_lm_head.1} parent=1 // pred_fallthru
      _
    // Predicated region
    $region34: #{bert_masked_lm_head.1} parent=1 // pred_check
      _
    $region35: #{bert_masked_lm_head.1} parent=1 // pred_check_branch
      %63 = sbr.rel (0) target = $region37
    $region36: #{bert_masked_lm_head.1} parent=1 // pred_region
      %64 = dma.done [#allocation7], 512
    $region37: #{bert_masked_lm_head.1} parent=1 // pred_fallthru
      _
    // Predicated region
    $region38: #{bert_masked_lm_head.1} parent=1 // pred_check
      _
    $region39: #{bert_masked_lm_head.1} parent=1 // pred_check_branch
      %66 = sbr.rel (0) target = $region41
    $region40: #{bert_masked_lm_head.1} parent=1 // pred_region
      %67 = dma.done [#allocation7], 512
    $region41: #{bert_masked_lm_head.1} parent=1 // pred_fallthru
      _
    %p68 = scmp.eq.s32.totalorder 0, 0
    // Predicated region
    $region42: #{bert_masked_lm_head.1} parent=1 // pred_check
      %p69 = pneg %p68
    $region43: #{bert_masked_lm_head.1} parent=1 // pred_check_branch
      %71 = sbr.rel (%p69) target = $region45
    $region44: #{bert_masked_lm_head.1} parent=1 // pred_region
      %v72 = vld [vmem:[#allocation3] sm:$0xff]
      %v73 = vld [vmem:[#allocation3 + $0x8] sm:$0xff]
      %v74 = vld [vmem:[#allocation6] sm:$0xff]
      %v75 = vld [vmem:[#allocation6 + $0x8] sm:$0xff]
      %v76 = vld [vmem:[#allocation6 + $0x10] sm:$0xff]
      %v77 = vld [vmem:[#allocation6 + $0x18] sm:$0xff]
      %v78 = vld [vmem:[%s2] sm:$0x1]
      %v80 = vlaneseq
      %v81 = vshrl.u32 %v80, 7
      %v82 = vsub.s32 0, %v81
      %v83 = vrot.slane %v78, %v82
      %vm85 = vcmask 261120
      %v87 = vsel %vm85, %v72, 0
      %v90 = vsel %vm85, %v73, 0
      %92 = vmatprep.subr.mxu0 0.0
      %93 = vmatpush1.msra.mxu0 0.0
      %94 = vmatprep.subr.mxu0 0.0
      %95 = vmatpush1.msra.mxu0 0.0
      %96 = vmatprep.subr.mxu0 0.0
      %97 = vmatpush1.msra.mxu0 0.0
      %98 = vmatprep.subr.mxu0 0.0
      %99 = vmatpush1.msra.mxu0 0.0
      %100 = vmatprep.subr.mxu0 0.0
      %101 = vmatpush1.msra.mxu0 0.0
      %102 = vmatprep.subr.mxu0 0.0
      %103 = vmatpush1.msra.mxu0 0.0
      %104 = vmatprep.subr.mxu0 0.0
      %105 = vmatpush1.msra.mxu0 0.0
      %106 = vmatprep.subr.mxu0 0.0
      %107 = vmatpush1.msra.mxu0 0.0
      %108 = vmatprep.subr.mxu0 0.0
      %109 = vmatpush1.msra.mxu0 0.0
      %110 = vmatprep.subr.mxu0 0.0
      %111 = vmatpush1.msra.mxu0 0.0
      %112 = vmatprep.subr.mxu0 0.0
      %113 = vmatpush1.msra.mxu0 0.0
      %114 = vmatprep.subr.mxu0 0.0
      %115 = vmatpush1.msra.mxu0 0.0
      %116 = vmatprep.subr.mxu0 0.0
      %117 = vmatpush1.msra.mxu0 %v77
      %118 = vmatprep.subr.mxu0 0.0
      %119 = vmatpush1.msra.mxu0 %v76
      %120 = vmatprep.subr.mxu0 0.0
      %121 = vmatpush1.msra.mxu0 %v75
      %122 = vmatprep.subr.mxu0 0.0
      %123 = vmatpush1.msra.mxu0 %v74
      %124 = vmatprep.subr.mxu0 0.0
      %125 = vmatpush2.msra.mxu0 0.0
      %126 = vmatprep.subr.mxu0 0.0
      %127 = vmatpush2.msra.mxu0 0.0
      %128 = vmatprep.subr.mxu0 0.0
      %129 = vmatpush2.msra.mxu0 0.0
      %130 = vmatprep.subr.mxu0 0.0
      %131 = vmatpush2.msra.mxu0 0.0
      %132 = vmatprep.subr.mxu0 0.0
      %133 = vmatpush2.msra.mxu0 0.0
      %134 = vmatprep.subr.mxu0 0.0
      %135 = vmatpush2.msra.mxu0 0.0
      %136 = vmatprep.subr.mxu0 0.0
      %137 = vmatpush2.msra.mxu0 0.0
      %138 = vmatprep.subr.mxu0 0.0
      %139 = vmatpush2.msra.mxu0 0.0
      %140 = vmatprep.subr.mxu0 0.0
      %141 = vmatpush2.msra.mxu0 0.0
      %142 = vmatprep.subr.mxu0 0.0
      %143 = vmatpush2.msra.mxu0 0.0
      %144 = vmatprep.subr.mxu0 0.0
      %145 = vmatpush2.msra.mxu0 0.0
      %146 = vmatprep.subr.mxu0 0.0
      %147 = vmatpush2.msra.mxu0 0.0
      %148 = vmatprep.subr.mxu0 0.0
      %149 = vmatpush2.msra.mxu0 0.0
      %150 = vmatprep.subr.mxu0 0.0
      %151 = vmatpush2.msra.mxu0 0.0
      %152 = vmatprep.subr.mxu0 0.0
      %153 = vmatpush2.msra.mxu0 0.0
      %154 = vmatprep.subr.mxu0 0.0
      %155 = vmatpush2.msra.mxu0 0.0
      %156 = vmatprep.mubr.f32.mxu0 0.0
      %157 = vmatmul.mubr.f32.gmra.mxu0 %v87
      %v158 = vpop.f32.mrf.mxu0
      %v159 = vadd.f32 %v83, %v158
      %v160 = vpop.f32.mrf.mxu0
      %161 = vmatprep.mubr.f32.mxu0 0.0
      %162 = vmatmul.mubr.f32.gmra.mxu0 %v90
      %v163 = vpop.f32.mrf.mxu0
      %v164 = vadd.f32 %v83, %v163
      %v165 = vpop.f32.mrf.mxu0
      %166 = vdwg.mxu0
      %v167 = vmul.f32 %v159, 0.5
      %v168 = vmul.f32 %v164, 0.5
      %v169 = vmul.f32 %v159, 0.044715
      %v170 = vmul.f32 %v164, 0.044715
      %v171 = vmul.f32 %v169, %v159
      %v172 = vmul.f32 %v170, %v164
      %v173 = vmul.f32 %v171, %v159
      %v174 = vmul.f32 %v172, %v164
      %v175 = vadd.f32 %v159, %v173
      %v176 = vadd.f32 %v164, %v174
      %v177 = vmul.f32 %v175, 0.7978846
      %v178 = vmul.f32 %v176, 0.7978846
      %v179 = vtanh.pop %v177
      %v180 = vtanh.pop %v178
      %v181 = vadd.f32 %v179, 1.0
      %v182 = vadd.f32 %v180, 1.0
      %v183 = vmul.f32 %v167, %v181
      %v184 = vmul.f32 %v168, %v182
      %v185 = vsel %vm85, %v183, 0.0
      %186 = vadd.xlane.f32.xlu0 %v185
      %v187 = vpop.xlane.xlu0 %186
      %v188 = vsel %vm85, %v184, 0.0
      %189 = vadd.xlane.f32.xlu0 %v188
      %v190 = vpop.xlane.xlu0 %189
      %v191 = vrcp.pop 32.0
      %v192 = vmul.f32 %v187, %v191
      %v193 = vmul.f32 %v190, %v191
      %v194 = vsub.f32 %v183, %v192
      %v195 = vsub.f32 %v184, %v193
      %v196 = vmul.f32 %v194, %v194
      %v197 = vmul.f32 %v195, %v195
      %v198 = vsel %vm85, %v196, 0.0
      %199 = vadd.xlane.f32.xlu0 %v198
      %v200 = vpop.xlane.xlu0 %199
      %v201 = vsel %vm85, %v197, 0.0
      %202 = vadd.xlane.f32.xlu0 %v201
      %v203 = vpop.xlane.xlu0 %202
      %v204 = vmul.f32 %v200, %v191
      %v205 = vmul.f32 %v203, %v191
      %v206 = vadd.f32 %v204, 1e-05
      %v207 = vadd.f32 %v205, 1e-05
      %v208 = vrsqrt.pop %v206
      %v209 = vrsqrt.pop %v207
      %v210 = vmul.f32 %v194, %v208
      %v211 = vmul.f32 %v195, %v209
      %v212 = vld [vmem:[%s3] sm:$0x1]
      %v214 = vlaneseq
      %v215 = vshrl.u32 %v214, 7
      %v216 = vsub.s32 0, %v215
      %v217 = vrot.slane %v212, %v216
      %v219 = vmul.f32 %v210, %v217
      %v220 = vmul.f32 %v211, %v217
      %v221 = vld [vmem:[%s4] sm:$0x1]
      %v223 = vlaneseq
      %v224 = vshrl.u32 %v223, 7
      %v225 = vsub.s32 0, %v224
      %v226 = vrot.slane %v221, %v225
      %v228 = vadd.f32 %v219, %v226
      %v229 = vadd.f32 %v220, %v226
      %230 = vst.msk [vmem:[#allocation2] sm:$0xff] %vm85, %v228
      %231 = vst.msk [vmem:[#allocation2 + $0x8] sm:$0xff] %vm85, %v229
    $region45: #{bert_masked_lm_head.1} parent=1 // pred_fallthru
      _
    %v232 = vld [vmem:[#allocation2] sm:$0xff]
    %v233 = vld [vmem:[#allocation2 + $0x8] sm:$0xff]
    %v234 = vld [vmem:[#allocation8] sm:$0xff]
    %v235 = vld [vmem:[#allocation8 + $0x8] sm:$0xff]
    %v236 = vld [vmem:[#allocation8 + $0x10] sm:$0xff]
    %v237 = vld [vmem:[#allocation8 + $0x18] sm:$0xff]
    %v238 = vld [vmem:[%s6] sm:$0x1]
    %v240 = vlaneseq
    %v241 = vshrl.u32 %v240, 7
    %v242 = vsub.s32 0, %v241
    %v243 = vrot.slane %v238, %v242
    %vm245 = vcmask 261120
    %v247 = vsel %vm245, %v232, 0
    %v250 = vsel %vm245, %v233, 0
    %252 = vmatprep.subr.mxu0 0.0
    %253 = vmatpush1.msra.mxu0 0.0
    %254 = vmatprep.subr.mxu0 0.0
    %255 = vmatpush1.msra.mxu0 0.0
    %256 = vmatprep.subr.mxu0 0.0
    %257 = vmatpush1.msra.mxu0 0.0
    %258 = vmatprep.subr.mxu0 0.0
    %259 = vmatpush1.msra.mxu0 0.0
    %260 = vmatprep.subr.mxu0 0.0
    %261 = vmatpush1.msra.mxu0 0.0
    %262 = vmatprep.subr.mxu0 0.0
    %263 = vmatpush1.msra.mxu0 0.0
    %264 = vmatprep.subr.mxu0 0.0
    %265 = vmatpush1.msra.mxu0 0.0
    %266 = vmatprep.subr.mxu0 0.0
    %267 = vmatpush1.msra.mxu0 0.0
    %268 = vmatprep.subr.mxu0 0.0
    %269 = vmatpush1.msra.mxu0 0.0
    %270 = vmatprep.subr.mxu0 0.0
    %271 = vmatpush1.msra.mxu0 0.0
    %272 = vmatprep.subr.mxu0 0.0
    %273 = vmatpush1.msra.mxu0 0.0
    %274 = vmatprep.subr.mxu0 0.0
    %275 = vmatpush1.msra.mxu0 0.0
    %276 = vmatprep.subr.mxu0 0.0
    %277 = vmatpush1.msra.mxu0 %v237
    %278 = vmatprep.subr.mxu0 0.0
    %279 = vmatpush1.msra.mxu0 %v236
    %280 = vmatprep.subr.mxu0 0.0
    %281 = vmatpush1.msra.mxu0 %v235
    %282 = vmatprep.subr.mxu0 0.0
    %283 = vmatpush1.msra.mxu0 %v234
    %284 = vmatprep.subr.mxu0 0.0
    %285 = vmatpush2.msra.mxu0 0.0
    %286 = vmatprep.subr.mxu0 0.0
    %287 = vmatpush2.msra.mxu0 0.0
    %288 = vmatprep.subr.mxu0 0.0
    %289 = vmatpush2.msra.mxu0 0.0
    %290 = vmatprep.subr.mxu0 0.0
    %291 = vmatpush2.msra.mxu0 0.0
    %292 = vmatprep.subr.mxu0 0.0
    %293 = vmatpush2.msra.mxu0 0.0
    %294 = vmatprep.subr.mxu0 0.0
    %295 = vmatpush2.msra.mxu0 0.0
    %296 = vmatprep.subr.mxu0 0.0
    %297 = vmatpush2.msra.mxu0 0.0
    %298 = vmatprep.subr.mxu0 0.0
    %299 = vmatpush2.msra.mxu0 0.0
    %300 = vmatprep.subr.mxu0 0.0
    %301 = vmatpush2.msra.mxu0 0.0
    %302 = vmatprep.subr.mxu0 0.0
    %303 = vmatpush2.msra.mxu0 0.0
    %304 = vmatprep.subr.mxu0 0.0
    %305 = vmatpush2.msra.mxu0 0.0
    %306 = vmatprep.subr.mxu0 0.0
    %307 = vmatpush2.msra.mxu0 0.0
    %308 = vmatprep.subr.mxu0 0.0
    %309 = vmatpush2.msra.mxu0 0.0
    %310 = vmatprep.subr.mxu0 0.0
    %311 = vmatpush2.msra.mxu0 0.0
    %312 = vmatprep.subr.mxu0 0.0
    %313 = vmatpush2.msra.mxu0 0.0
    %314 = vmatprep.subr.mxu0 0.0
    %315 = vmatpush2.msra.mxu0 0.0
    %316 = vmatprep.mubr.f32.mxu0 0.0
    %317 = vmatmul.mubr.f32.gmra.mxu0 %v247
    %v318 = vpop.f32.mrf.mxu0
    %v319 = vadd.f32 %v243, %v318
    %v320 = vpop.f32.mrf.mxu0
    %321 = vmatprep.mubr.f32.mxu0 0.0
    %322 = vmatmul.mubr.f32.gmra.mxu0 %v250
    %v323 = vpop.f32.mrf.mxu0
    %v324 = vadd.f32 %v243, %v323
    %v325 = vpop.f32.mrf.mxu0
    %326 = vdwg.mxu0
    %327 = vst [vmem:[#allocation9] sm:$0xff] %v319
    %328 = vst [vmem:[#allocation9 + $0x8] sm:$0xff] %v324
    // Predicated region
    $region46: #{bert_masked_lm_head.1} parent=1 // pred_check
      _
    $region47: #{bert_masked_lm_head.1} parent=1 // pred_check_branch
      %330 = sbr.rel (0) target = $region49
    $region48: #{bert_masked_lm_head.1} parent=1 // pred_region
      %s332 = ssub.s32 256, 256
      %333 = vsyncadd [#allocation5], %s332
      %s334 = sshll.u32 [#allocation9], 4
      %s335 = int_to_ptr.vmem [resolvable:$true] %s334
      %340 = dma.vmem_to_hbm [thread:$0]  %s335, 256, %s7, [#allocation5], 128, 128, 8
    $region49: #{bert_masked_lm_head.1} parent=1 // pred_fallthru
      _
    // Predicated region
    $region50: #{bert_masked_lm_head.1} parent=1 // pred_check
      _
    $region51: #{bert_masked_lm_head.1} parent=1 // pred_check_branch
      %342 = sbr.rel (0) target = $region53
    $region52: #{bert_masked_lm_head.1} parent=1 // pred_region
      %343 = dma.done [#allocation5], 256
    $region53: #{bert_masked_lm_head.1} parent=1 // pred_fallthru
      _
    %344 = vsyncpa [#allocation4], 1
    %345 = vsyncpa [#allocation7], 1
    %346 = vsyncpa [#allocation5], 1

</llo_original>
